<compile_context>
chip_gen: v6e
topology: v6e:2x2x1
jax: 0.10.0
libtpu: 0.0.40
codegen_flags: <defaults>
</compile_context>

<pallas_src>
import jax
import jax.numpy as jnp
from jax.experimental import pallas as pl
from jax.experimental.pallas import tpu as pltpu

SOFTPLUS_BETA = 100.0
SOFTPLUS_INV_BETA = 1.0 / SOFTPLUS_BETA
SOFTPLUS_THRESHOLD = 20.0  # PyTorch default threshold for softplus


def _round_up(x, m):
    return ((x + m - 1) // m) * m


def _gs_regresser_kernel(x_ref, wt_ref, b_ref, o_ref):
    # x_ref: (tm, Fp)   input rows (lane-packed features)
    # wt_ref: (Fp, Fp)  pre-transposed (in, out) block-diagonal weight, f32, resident
    # b_ref: (1, Fp)    pre-tiled bias, f32, resident
    # o_ref: (tm, Fp)
    x = x_ref[...].astype(jnp.float32)

    # softplus with beta=100, threshold=20 (matches torch.nn.functional.softplus).
    # Upper clamp keeps exp() finite even for garbage rows of a partial last block
    # (their writes are dropped anyway).
    z = SOFTPLUS_BETA * x
    z_safe = jnp.minimum(z, SOFTPLUS_THRESHOLD)
    sp = jnp.where(z > SOFTPLUS_THRESHOLD,
                   x,
                   jnp.log1p(jnp.exp(z_safe)) * SOFTPLUS_INV_BETA)

    # nn.Linear: y = sp @ W^T + b.  Weight already transposed/block-diagonalized in
    # the wrapper -> plain MXU matmul with f32 accumulation, no per-step XLU work.
    y = jnp.dot(sp, wt_ref[...], preferred_element_type=jnp.float32)
    o_ref[...] = (y + b_ref[...]).astype(o_ref.dtype)


def pack_gs_regresser_params(weight, bias):
    """One-time parameter packing (do this at load time, not per forward call).

    weight: (F, F) as in nn.Linear (out, in).  bias: (F,).
    Returns (wt_packed (Fp, Fp) f32, b_packed (1, Fp) f32, pack).
    """
    F = weight.shape[0]
    pack = 128 // F if (F < 128 and 128 % F == 0) else 1

    wt = weight.astype(jnp.float32).T                      # (in, out)
    if pack > 1:
        wt_packed = jnp.kron(jnp.eye(pack, dtype=jnp.float32), wt)
        b_packed = jnp.tile(bias.astype(jnp.float32), pack)
    else:
        wt_packed = wt
        b_packed = bias.astype(jnp.float32)
    return wt_packed, b_packed.reshape(1, F * pack), pack


def gs_pointcloud_regresser_packed(x, wt_packed, b_packed, pack, *, tile_m=2048):
    """Forward pass using pre-packed parameters (hot path)."""
    orig_shape = x.shape
    F = orig_shape[-1]
    Fp = F * pack
    x2d = x.reshape(-1, F)
    M = x2d.shape[0]

    # Pad only so rows pack evenly into 128-lane rows (<= pack-1 rows; usually 0).
    m_pad = _round_up(max(M, 1), pack)
    if m_pad != M:
        x2d = jnp.pad(x2d, ((0, m_pad - M), (0, 0)))
    m_packed = m_pad // pack
    xp = x2d.reshape(m_packed, Fp)                         # free row-major reshape

    # Tile: multiple of 8 sublanes; capped so the grid has >= 4 steps when there is
    # enough work -> v7x's 2 TensorCores both get grid steps ("parallel" sharding)
    # and the double-buffered pipeline has something to overlap.
    tile_m = max(8, _round_up(tile_m, 8))
    tm = max(8, min(tile_m, _round_up(pl.cdiv(m_packed, 4), 8)))
    grid = (pl.cdiv(m_packed, tm),)                        # partial last block OK

    out_p = pl.pallas_call(
        _gs_regresser_kernel,
        out_shape=jax.ShapeDtypeStruct((m_packed, Fp), x2d.dtype),
        grid_spec=pltpu.PrefetchScalarGridSpec(
            num_scalar_prefetch=0,
            grid=grid,
            in_specs=[
                pl.BlockSpec((tm, Fp), lambda i: (i, 0)),   # streamed input rows
                pl.BlockSpec((Fp, Fp), lambda i: (0, 0)),   # resident packed W^T
                pl.BlockSpec((1, Fp), lambda i: (0, 0)),    # resident packed bias
            ],
            out_specs=pl.BlockSpec((tm, Fp), lambda i: (i, 0)),
        ),
        compiler_params=pltpu.CompilerParams(
            dimension_semantics=("parallel",),              # shard grid across TCs
            # Default scoped VMEM is ample for tm<=4096 packed rows on all of
            # v5e/v6e/v7x; set vmem_limit_bytes here only if sweeping tm higher.
        ),
    )(xp, wt_packed, b_packed)

    out2d = out_p.reshape(m_pad, F)
    if m_pad != M:
        out2d = out2d[:M]
    return out2d.reshape(orig_shape)


def gs_pointcloud_regresser(x, weight, bias, *, tile_m=2048):
    """Convenience wrapper: packs params then runs the kernel.

    Prefer packing once with pack_gs_regresser_params() and calling
    gs_pointcloud_regresser_packed() in hot loops (or rely on jit constant-folding).
    """
    wt_packed, b_packed, pack = pack_gs_regresser_params(weight, bias)
    return gs_pointcloud_regresser_packed(x, wt_packed, b_packed, pack,
                                          tile_m=tile_m)


def init_linear_params(key, in_features, out_features, dtype=jnp.float32):
    """Deterministic init mimicking nn.Linear default (uniform +-1/sqrt(in))."""
    kw, kb = jax.random.split(key)
    bound = 1.0 / jnp.sqrt(jnp.array(in_features, dtype=jnp.float32))
    weight = jax.random.uniform(kw, (out_features, in_features),
                                minval=-bound, maxval=bound, dtype=dtype)
    bias = jax.random.uniform(kb, (out_features,),
                              minval=-bound, maxval=bound, dtype=dtype)
    return weight, bias


def reference_forward(x, weight, bias):
    """Pure-JAX reference of the PyTorch forward (for sanity checking)."""
    z = SOFTPLUS_BETA * x
    sp = jnp.where(z > SOFTPLUS_THRESHOLD,
                   x,
                   jnp.log1p(jnp.exp(jnp.minimum(z, SOFTPLUS_THRESHOLD)))
                   * SOFTPLUS_INV_BETA)
    return sp @ weight.T + bias


if __name__ == "__main__":
    # out_channels of the Gaussian-Splatting head; sum = 32 = F
    out_channels = (8, 8, 16)
    F = sum(out_channels)

    batch, num_points = 2, 8           # flattened rows M = 16 (not tile-aligned)

    key = jax.random.PRNGKey(0)
    kx, kp = jax.random.split(key)

    x = jax.random.normal(kx, (batch, num_points, F), dtype=jnp.float32)
    weight, bias = init_linear_params(kp, F, F)

    # Pack parameters once (load-time), then run the kernel.
    wt_packed, b_packed, pack = pack_gs_regresser_params(weight, bias)
    y = gs_pointcloud_regresser_packed(x, wt_packed, b_packed, pack)
    y = jax.block_until_ready(y)

    # correctness check against pure-JAX reference of the PyTorch semantics
    y_ref = reference_forward(x, weight, bias)
    assert y.shape == x.shape
    assert jnp.allclose(y, y_ref, atol=1e-5, rtol=1e-5), "mismatch vs reference"

    print("KERNEL_OK")
</pallas_src>

<mosaic_0001>
module attributes {stable_mosaic.version = 11 : i64} {
  func.func @_gs_regresser_kernel(%arg0: i32, %arg1: memref<8x128xf32, #tpu.memory_space<vmem>>, %arg2: memref<128x128xf32, #tpu.memory_space<vmem>>, %arg3: memref<1x128xf32, #tpu.memory_space<vmem>>, %arg4: memref<8x128xf32, #tpu.memory_space<vmem>>) attributes {dimension_semantics = [#tpu.dimension_semantics<parallel>], iteration_bounds = array<i64: 1>, scalar_prefetch = 0 : i64, scratch_operands = 0 : i64, tpu.core_type = #tpu.core_type<tc>, window_params = [{transform_indices = @transform_0, window_bounds = array<i64: 8, 128>}, {pipeline_mode = #tpu.pipeline_mode<synchronous>, transform_indices = @transform_1, window_bounds = array<i64: 128, 128>}, {pipeline_mode = #tpu.pipeline_mode<synchronous>, transform_indices = @transform_2, window_bounds = array<i64: 1, 128>}, {transform_indices = @transform_3, window_bounds = array<i64: 8, 128>}]} {
    %c0 = arith.constant 0 : index
    %c0_0 = arith.constant 0 : index
    %0 = vector.load %arg1[%c0, %c0_0] : memref<8x128xf32, #tpu.memory_space<vmem>>, vector<8x128xf32>
    %cst = arith.constant 1.000000e+02 : f32
    %1 = vector.broadcast %cst : f32 to vector<8x128xf32>
    %2 = arith.mulf %1, %0 : vector<8x128xf32>
    %cst_1 = arith.constant 2.000000e+01 : f32
    %3 = vector.broadcast %cst_1 : f32 to vector<8x128xf32>
    %4 = arith.minimumf %2, %3 : vector<8x128xf32>
    %cst_2 = arith.constant 2.000000e+01 : f32
    %5 = vector.broadcast %cst_2 : f32 to vector<8x128xf32>
    %6 = arith.cmpf ogt, %2, %5 : vector<8x128xf32>
    %7 = math.exp %4 : vector<8x128xf32>
    %8 = math.log1p %7 : vector<8x128xf32>
    %cst_3 = arith.constant 0.00999999977 : f32
    %9 = vector.broadcast %cst_3 : f32 to vector<8x128xf32>
    %10 = arith.mulf %8, %9 : vector<8x128xf32>
    %11 = arith.select %6, %0, %10 : vector<8x128xi1>, vector<8x128xf32>
    %c0_4 = arith.constant 0 : index
    %c0_5 = arith.constant 0 : index
    %12 = vector.load %arg2[%c0_4, %c0_5] : memref<128x128xf32, #tpu.memory_space<vmem>>, vector<128x128xf32>
    %cst_6 = arith.constant dense<0.000000e+00> : vector<8x128xf32>
    %13 = tpu.matmul %11, %12, %cst_6 {dimension_numbers = #tpu.dot_dimension_numbers<[1], [0], [0], [1], [0, 0, 1, 1], [], []>} : vector<8x128xf32>, vector<128x128xf32>, vector<8x128xf32> -> vector<8x128xf32>
    %c0_7 = arith.constant 0 : index
    %c0_8 = arith.constant 0 : index
    %14 = vector.load %arg3[%c0_7, %c0_8] : memref<1x128xf32, #tpu.memory_space<vmem>>, vector<1x128xf32>
    %15 = vector.broadcast %14 : vector<1x128xf32> to vector<8x128xf32>
    %16 = arith.addf %13, %15 : vector<8x128xf32>
    %c0_9 = arith.constant 0 : index
    %c0_10 = arith.constant 0 : index
    %17 = vector.load %arg4[%c0_9, %c0_10] : memref<8x128xf32, #tpu.memory_space<vmem>>, vector<8x128xf32>
    tpu.vector_store %arg4[%c0_9, %c0_10], %16 {strides = array<i32>} : memref<8x128xf32, #tpu.memory_space<vmem>>, vector<8x128xf32>,
    return
  }
  func.func @transform_0(%arg0: i32) -> (i32, i32) {
    %c0_i32 = arith.constant 0 : i32
    %c0_i32_0 = arith.constant 0 : i32
    return %arg0, %c0_i32 : i32, i32
  }
  func.func @transform_1(%arg0: i32) -> (i32, i32) {
    %c0_i32 = arith.constant 0 : i32
    %c0_i32_0 = arith.constant 0 : i32
    %c0_i32_1 = arith.constant 0 : i32
    return %c0_i32, %c0_i32_0 : i32, i32
  }
  func.func @transform_2(%arg0: i32) -> (i32, i32) {
    %c0_i32 = arith.constant 0 : i32
    %c0_i32_0 = arith.constant 0 : i32
    %c0_i32_1 = arith.constant 0 : i32
    return %c0_i32, %c0_i32_0 : i32, i32
  }
  func.func @transform_3(%arg0: i32) -> (i32, i32) {
    %c0_i32 = arith.constant 0 : i32
    %c0_i32_0 = arith.constant 0 : i32
    return %arg0, %c0_i32 : i32, i32
  }
}

</mosaic_0001>

<llo_original>
// kernel: tpu_custom_call.1
$region0: #{tpu_custom_call.1}
  #allocation0 [shape = 'u32[]', space=smem, size = 0x4, offset = 0x4, fixed_abs, tag = 'smem constant byte address 0x4 - core index']
  #allocation1 [shape = 'u32[144,128]{1,0:T(1,128)}', space=vmem, size = 0x12000, scoped, tag = 'internal scratch']
  %s0 = inlined_call_operand.hbm [shape: f32[4,128], index: 0, kind: input, shape index: {}]
  %s1 = inlined_call_operand.hbm [shape: f32[128,128], index: 1, kind: input, shape index: {}]
  %s2 = inlined_call_operand.vmem [shape: f32[1,128], index: 2, kind: input, shape index: {}]
  %s3 = inlined_call_operand.hbm [shape: f32[4,128], index: 3, kind: output, shape index: {}]
  %s4 = sld [smem:[#allocation0]]
  $region30: #{tpu_custom_call.1} parent=0
    _
  %s6 = ssub.s32 1, %s4
  %s7 = scalar_select 0, %s6, %s4
  $region1: #{tpu_custom_call.1} parent=0
    #allocation2 [shape = 'u8[4096]{0}', space=vmem, size = 0x1000, scoped, tag = 'input window, operand 0, single buffered']
    #allocation3 [shape = 's32[1]{0}', space=sflag, size = 0x4, scoped, tag = 'scoped memory for tpu_custom_call.1']
    #allocation4 [shape = 's32[1]{0}', space=sflag, size = 0x4, scoped, tag = 'scoped memory for tpu_custom_call.1']
    #allocation5 [shape = 'u8[65536]{0}', space=vmem, size = 0x10000, scoped, tag = 'input window, operand 1, single buffered']
    #allocation6 [shape = 's32[1]{0}', space=sflag, size = 0x4, scoped, tag = 'scoped memory for tpu_custom_call.1']
    #allocation7 [shape = 'u8[4096]{0}', space=vmem, size = 0x1000, scoped, tag = 'output window, operand 0, single buffered']
    %8 = vsyncpa [#allocation3], 0
    %9 = vsyncpa [#allocation6], 0
    %10 = vsyncpa [#allocation4], 0
    // Predicated region
    $region2: #{tpu_custom_call.1} parent=1 // pred_check
      _
    $region3: #{tpu_custom_call.1} parent=1 // pred_check_branch
      %12 = sbr.rel (0) target = $region5
    $region4: #{tpu_custom_call.1} parent=1 // pred_region
      %s14 = ssub.s32 128, 64
      %15 = vsyncadd [#allocation3], %s14
      %s16 = sshll.u32 [#allocation2], 4
      %s17 = int_to_ptr.vmem [resolvable:$true] %s16
      %22 = dma.hbm_to_vmem [thread:$0]  %s0, 64, %s17, [#allocation3], 64, 64, 4
    $region5: #{tpu_custom_call.1} parent=1 // pred_fallthru
      _
    // Predicated region
    $region6: #{tpu_custom_call.1} parent=1 // pred_check
      _
    $region7: #{tpu_custom_call.1} parent=1 // pred_check_branch
      %24 = sbr.rel (0) target = $region9
    $region8: #{tpu_custom_call.1} parent=1 // pred_region
      %s26 = ssub.s32 2048, 2048
      %27 = vsyncadd [#allocation6], %s26
      %s28 = sshll.u32 [#allocation5], 4
      %s29 = int_to_ptr.vmem [resolvable:$true] %s28
      %34 = dma.hbm_to_vmem [thread:$0]  %s1, 2048, %s29, [#allocation6], 128, 128, 8
    $region9: #{tpu_custom_call.1} parent=1 // pred_fallthru
      _
    // Predicated region
    $region10: #{tpu_custom_call.1} parent=1 // pred_check
      _
    $region11: #{tpu_custom_call.1} parent=1 // pred_check_branch
      %36 = sbr.rel (0) target = $region13
    $region12: #{tpu_custom_call.1} parent=1 // pred_region
      _
    $region13: #{tpu_custom_call.1} parent=1 // pred_fallthru
      _
    // Predicated region
    $region14: #{tpu_custom_call.1} parent=1 // pred_check
      _
    $region15: #{tpu_custom_call.1} parent=1 // pred_check_branch
      %38 = sbr.rel (0) target = $region17
    $region16: #{tpu_custom_call.1} parent=1 // pred_region
      %39 = dma.done [#allocation3], 128
    $region17: #{tpu_custom_call.1} parent=1 // pred_fallthru
      _
    // Predicated region
    $region18: #{tpu_custom_call.1} parent=1 // pred_check
      _
    $region19: #{tpu_custom_call.1} parent=1 // pred_check_branch
      %41 = sbr.rel (0) target = $region21
    $region20: #{tpu_custom_call.1} parent=1 // pred_region
      %42 = dma.done [#allocation6], 2048
    $region21: #{tpu_custom_call.1} parent=1 // pred_fallthru
      _
    %v43 = vld [vmem:[#allocation2] sm:$0xff]
    %v44 = vmul.f32 %v43, 100.0
    %v45 = vmin.f32 %v44, 20.0
    %vm46 = vcmp.gt.f32.partialorder %v44, 20.0
    %v47 = vmul.f32 %v45, 1.442695
    %v48 = vpow.pop %v47
    %v49 = vadd.f32 %v48, 1.0
    %v50 = vlog2.pop %v49
    %v51 = vmul.f32 %v50, 0.6931472
    %v52 = vmul.f32 -0.5, %v48
    %v53 = vadd.f32 %v52, 1.0
    %v54 = vmul.f32 %v53, %v48
    %v55 = vand.u32 2147483647, %v48
    %vm56 = vcmp.lt.f32.partialorder %v55, 0.0004427343
    %v57 = vsel %vm56, %v54, %v51
    %v58 = vmul.f32 %v57, 0.01
    %v59 = vsel %vm46, %v43, %v58
    %v60 = vld [vmem:[#allocation5] sm:$0xff]
    %v61 = vld [vmem:[#allocation5 + $0x8] sm:$0xff]
    %v62 = vld [vmem:[#allocation5 + $0x10] sm:$0xff]
    %v63 = vld [vmem:[#allocation5 + $0x18] sm:$0xff]
    %v64 = vld [vmem:[#allocation5 + $0x20] sm:$0xff]
    %v65 = vld [vmem:[#allocation5 + $0x28] sm:$0xff]
    %v66 = vld [vmem:[#allocation5 + $0x30] sm:$0xff]
    %v67 = vld [vmem:[#allocation5 + $0x38] sm:$0xff]
    %v68 = vld [vmem:[#allocation5 + $0x40] sm:$0xff]
    %v69 = vld [vmem:[#allocation5 + $0x48] sm:$0xff]
    %v70 = vld [vmem:[#allocation5 + $0x50] sm:$0xff]
    %v71 = vld [vmem:[#allocation5 + $0x58] sm:$0xff]
    %v72 = vld [vmem:[#allocation5 + $0x60] sm:$0xff]
    %v73 = vld [vmem:[#allocation5 + $0x68] sm:$0xff]
    %v74 = vld [vmem:[#allocation5 + $0x70] sm:$0xff]
    %v75 = vld [vmem:[#allocation5 + $0x78] sm:$0xff]
    %v76 = vld [vmem:[%s2] sm:$0x1]
    %v78 = vlaneseq
    %v79 = vshrl.u32 %v78, 7
    %v80 = vsub.s32 0, %v79
    %v81 = vrot.slane %v76, %v80
    %83 = vmatprep.subr.mxu0 0.0
    %84 = vmatpush1.msra.mxu0 %v75
    %85 = vmatprep.subr.mxu0 0.0
    %86 = vmatpush1.msra.mxu0 %v74
    %87 = vmatprep.subr.mxu0 0.0
    %88 = vmatpush1.msra.mxu0 %v73
    %89 = vmatprep.subr.mxu0 0.0
    %90 = vmatpush1.msra.mxu0 %v72
    %91 = vmatprep.subr.mxu0 0.0
    %92 = vmatpush1.msra.mxu0 %v71
    %93 = vmatprep.subr.mxu0 0.0
    %94 = vmatpush1.msra.mxu0 %v70
    %95 = vmatprep.subr.mxu0 0.0
    %96 = vmatpush1.msra.mxu0 %v69
    %97 = vmatprep.subr.mxu0 0.0
    %98 = vmatpush1.msra.mxu0 %v68
    %99 = vmatprep.subr.mxu0 0.0
    %100 = vmatpush1.msra.mxu0 %v67
    %101 = vmatprep.subr.mxu0 0.0
    %102 = vmatpush1.msra.mxu0 %v66
    %103 = vmatprep.subr.mxu0 0.0
    %104 = vmatpush1.msra.mxu0 %v65
    %105 = vmatprep.subr.mxu0 0.0
    %106 = vmatpush1.msra.mxu0 %v64
    %107 = vmatprep.subr.mxu0 0.0
    %108 = vmatpush1.msra.mxu0 %v63
    %109 = vmatprep.subr.mxu0 0.0
    %110 = vmatpush1.msra.mxu0 %v62
    %111 = vmatprep.subr.mxu0 0.0
    %112 = vmatpush1.msra.mxu0 %v61
    %113 = vmatprep.subr.mxu0 0.0
    %114 = vmatpush1.msra.mxu0 %v60
    %115 = vmatprep.subr.mxu0 0.0
    %116 = vmatpush2.msra.mxu0 0.0
    %117 = vmatprep.subr.mxu0 0.0
    %118 = vmatpush2.msra.mxu0 0.0
    %119 = vmatprep.subr.mxu0 0.0
    %120 = vmatpush2.msra.mxu0 0.0
    %121 = vmatprep.subr.mxu0 0.0
    %122 = vmatpush2.msra.mxu0 0.0
    %123 = vmatprep.subr.mxu0 0.0
    %124 = vmatpush2.msra.mxu0 0.0
    %125 = vmatprep.subr.mxu0 0.0
    %126 = vmatpush2.msra.mxu0 0.0
    %127 = vmatprep.subr.mxu0 0.0
    %128 = vmatpush2.msra.mxu0 0.0
    %129 = vmatprep.subr.mxu0 0.0
    %130 = vmatpush2.msra.mxu0 0.0
    %131 = vmatprep.subr.mxu0 0.0
    %132 = vmatpush2.msra.mxu0 0.0
    %133 = vmatprep.subr.mxu0 0.0
    %134 = vmatpush2.msra.mxu0 0.0
    %135 = vmatprep.subr.mxu0 0.0
    %136 = vmatpush2.msra.mxu0 0.0
    %137 = vmatprep.subr.mxu0 0.0
    %138 = vmatpush2.msra.mxu0 0.0
    %139 = vmatprep.subr.mxu0 0.0
    %140 = vmatpush2.msra.mxu0 0.0
    %141 = vmatprep.subr.mxu0 0.0
    %142 = vmatpush2.msra.mxu0 0.0
    %143 = vmatprep.subr.mxu0 0.0
    %144 = vmatpush2.msra.mxu0 0.0
    %145 = vmatprep.subr.mxu0 0.0
    %146 = vmatpush2.msra.mxu0 0.0
    %147 = vmatprep.mubr.f32.mxu0 0.0
    %148 = vmatmul.mubr.f32.gmra.mxu0 %v59
    %v149 = vpop.f32.mrf.mxu0
    %v150 = vadd.f32 %v81, %v149
    %v151 = vpop.f32.mrf.mxu0
    %152 = vdwg.mxu0
    %153 = vst [vmem:[#allocation7] sm:$0xff] %v150
    // Predicated region
    $region22: #{tpu_custom_call.1} parent=1 // pred_check
      _
    $region23: #{tpu_custom_call.1} parent=1 // pred_check_branch
      %155 = sbr.rel (0) target = $region25
    $region24: #{tpu_custom_call.1} parent=1 // pred_region
      %s157 = ssub.s32 128, 64
      %158 = vsyncadd [#allocation4], %s157
      %s159 = sshll.u32 [#allocation7], 4
      %s160 = int_to_ptr.vmem [resolvable:$true] %s159
      %165 = dma.vmem_to_hbm [thread:$0]  %s160, 64, %s3, [#allocation4], 64, 64, 4
    $region25: #{tpu_custom_call.1} parent=1 // pred_fallthru
      _
    // Predicated region
    $region26: #{tpu_custom_call.1} parent=1 // pred_check
      _
    $region27: #{tpu_custom_call.1} parent=1 // pred_check_branch
      %167 = sbr.rel (0) target = $region29
    $region28: #{tpu_custom_call.1} parent=1 // pred_region
      %168 = dma.done [#allocation4], 128
    $region29: #{tpu_custom_call.1} parent=1 // pred_fallthru
      _
    %169 = vsyncpa [#allocation3], 1
    %170 = vsyncpa [#allocation6], 1
    %171 = vsyncpa [#allocation4], 1

</llo_original>
